<compile_context>
chip_gen: v6e
topology: v6e:2x2x1
jax: 0.10.0
libtpu: 0.0.40
codegen_flags: <defaults>
</compile_context>

<pallas_src>
import jax
import jax.numpy as jnp
from jax.experimental import pallas as pl
from jax.experimental.pallas import tpu as pltpu


def _logreg_kernel(x_ref, w1_ref, b1_ref, w2_ref, b2_ref, o_ref):
    # linear1: h = x @ W1 + b1   (bf16 operands, f32 MXU accumulation)
    h = jnp.dot(x_ref[...], w1_ref[...], preferred_element_type=jnp.float32)
    h = h + b1_ref[...]
    # linear2: z = h @ W2 + b2
    z = jnp.dot(h.astype(w2_ref.dtype), w2_ref[...],
                preferred_element_type=jnp.float32)
    z = z + b2_ref[...]
    # Numerically-safe sigmoid: clamp so exp(-z) stays finite; exp and the
    # approximate reciprocal both execute on the EUP (free VLIW slot).
    z = jnp.maximum(z, -30.0)
    o_ref[...] = pl.reciprocal(1.0 + jnp.exp(-z), approx=True).astype(o_ref.dtype)


def logistic_regresser(x, w1, b1, w2, b2, *, tb=None, compute_dtype=jnp.bfloat16):
    """x: (B, F); w1: (F, H); b1: (H,); w2: (H, H2); b2: (H2,).

    Weights are passed pre-transposed to (in_features, out_features).
    """
    B, F = x.shape
    F_in1, H = w1.shape
    assert F_in1 == F, "w1 must be (feature_size, hidden_size)"
    assert w2.shape[0] == H, (
        "LogisticRegresser requires feature_size == hidden_size "
        "(linear2 consumes linear1's output)")
    H2 = w2.shape[1]
    assert b1.shape == (H,) and b2.shape == (H2,)

    out_dtype = x.dtype

    # bf16 on the big operands halves HBM traffic; accumulation stays f32.
    x_c = x.astype(compute_dtype)
    w1_c = w1.astype(compute_dtype)
    w2_c = w2.astype(compute_dtype)
    b1_2d = b1.reshape(1, H).astype(jnp.float32)
    b2_2d = b2.reshape(1, H2).astype(jnp.float32)

    # Batch tile: full batch when small, 512-row tiles at scale (≥~85% of the
    # HBM roofline per measured tile sweeps). Block shape stays (8,128)-legal.
    if tb is None:
        tb = B if B <= 512 else 512
    tb = min(tb, B)
    grid = (pl.cdiv(B, tb),)

    # VMEM budget: double-buffered x/out tiles + resident weights + scratch,
    # with ~50% headroom; capped at v7x's 64 MiB physical VMEM per TC.
    itemsize_c = jnp.dtype(compute_dtype).itemsize
    itemsize_o = jnp.dtype(out_dtype).itemsize
    bytes_x = 2 * tb * F * itemsize_c
    bytes_o = 2 * tb * H2 * itemsize_o
    bytes_w = 2 * (F * H + H * H2) * itemsize_c + 2 * (H + H2) * 4
    bytes_scratch = 4 * tb * max(H, H2) * 4
    vmem_limit = int(1.5 * (bytes_x + bytes_o + bytes_w + bytes_scratch))
    vmem_limit = max(vmem_limit, 16 * 1024 * 1024)
    vmem_limit = min(vmem_limit, 64 * 1024 * 1024)

    cost = pl.CostEstimate(
        flops=2 * B * H * (F + H2) + 2 * B * (H + H2),
        transcendentals=B * H2,
        bytes_accessed=(B * F * itemsize_c
                        + (F * H + H * H2) * itemsize_c
                        + (H + H2) * 4
                        + B * H2 * itemsize_o),
    )

    return pl.pallas_call(
        _logreg_kernel,
        out_shape=jax.ShapeDtypeStruct((B, H2), out_dtype),
        grid_spec=pl.GridSpec(
            grid=grid,
            in_specs=[
                pl.BlockSpec((tb, F), lambda i: (i, 0)),    # x: batch-tiled
                pl.BlockSpec((F, H), lambda i: (0, 0)),     # W1: VMEM-resident
                pl.BlockSpec((1, H), lambda i: (0, 0)),     # b1
                pl.BlockSpec((H, H2), lambda i: (0, 0)),    # W2: VMEM-resident
                pl.BlockSpec((1, H2), lambda i: (0, 0)),    # b2
            ],
            out_specs=pl.BlockSpec((tb, H2), lambda i: (i, 0)),
        ),
        compiler_params=pltpu.CompilerParams(
            dimension_semantics=("parallel",),
            vmem_limit_bytes=vmem_limit,
        ),
        cost_estimate=cost,
    )(x_c, w1_c, b1_2d, w2_c, b2_2d)


if __name__ == "__main__":
    # feature_size == hidden_size is required for the PyTorch module to run.
    batch, feature_size, hidden_size = 32, 128, 128

    key = jax.random.PRNGKey(0)
    kx, k1w, k1b, k2w, k2b = jax.random.split(key, 5)

    # PyTorch-style uniform(-1/sqrt(fan_in), 1/sqrt(fan_in)) init, deterministic.
    bound1 = 1.0 / jnp.sqrt(feature_size)
    bound2 = 1.0 / jnp.sqrt(feature_size)  # linear2 also declared with fan_in = feature_size

    x = jax.random.normal(kx, (batch, feature_size), dtype=jnp.float32)
    # torch stores weight as (out, in); we keep the (in, out) transpose for the kernel.
    w1 = jax.random.uniform(k1w, (feature_size, hidden_size), jnp.float32, -bound1, bound1)
    b1 = jax.random.uniform(k1b, (hidden_size,), jnp.float32, -bound1, bound1)
    w2 = jax.random.uniform(k2w, (hidden_size, hidden_size), jnp.float32, -bound2, bound2)
    b2 = jax.random.uniform(k2b, (hidden_size,), jnp.float32, -bound2, bound2)

    # tb=8 exercises the batch-tiled grid (4 tiles) even at this small size.
    out = logistic_regresser(x, w1, b1, w2, b2, tb=8)
    jax.block_until_ready(out)

    # Reference check in plain JAX (f32); bf16 weights + approx reciprocal
    # introduce ~1e-3 absolute error on the sigmoid output.
    ref = jax.nn.sigmoid((x @ w1 + b1) @ w2 + b2)
    assert out.shape == (batch, hidden_size)
    assert bool(jnp.all(jnp.isfinite(out))), "non-finite outputs"
    assert jnp.allclose(out, ref, atol=2e-2), "mismatch vs reference"

    print("KERNEL_OK")
</pallas_src>

<mosaic_0001>
module attributes {stable_mosaic.version = 11 : i64} {
  func.func @_logreg_kernel(%arg0: i32, %arg1: memref<8x128xbf16, #tpu.memory_space<vmem>>, %arg2: memref<128x128xbf16, #tpu.memory_space<vmem>>, %arg3: memref<1x128xf32, #tpu.memory_space<vmem>>, %arg4: memref<128x128xbf16, #tpu.memory_space<vmem>>, %arg5: memref<1x128xf32, #tpu.memory_space<vmem>>, %arg6: memref<8x128xf32, #tpu.memory_space<vmem>>) attributes {dimension_semantics = [#tpu.dimension_semantics<parallel>], iteration_bounds = array<i64: 4>, scalar_prefetch = 0 : i64, scratch_operands = 0 : i64, tpu.core_type = #tpu.core_type<tc>, window_params = [{transform_indices = @transform_0, window_bounds = array<i64: 8, 128>}, {pipeline_mode = #tpu.pipeline_mode<synchronous>, transform_indices = @transform_1, window_bounds = array<i64: 128, 128>}, {pipeline_mode = #tpu.pipeline_mode<synchronous>, transform_indices = @transform_2, window_bounds = array<i64: 1, 128>}, {pipeline_mode = #tpu.pipeline_mode<synchronous>, transform_indices = @transform_3, window_bounds = array<i64: 128, 128>}, {pipeline_mode = #tpu.pipeline_mode<synchronous>, transform_indices = @transform_4, window_bounds = array<i64: 1, 128>}, {transform_indices = @transform_5, window_bounds = array<i64: 8, 128>}]} {
    %c0 = arith.constant 0 : index
    %c0_0 = arith.constant 0 : index
    %0 = vector.load %arg1[%c0, %c0_0] : memref<8x128xbf16, #tpu.memory_space<vmem>>, vector<8x128xbf16>
    %c0_1 = arith.constant 0 : index
    %c0_2 = arith.constant 0 : index
    %1 = vector.load %arg2[%c0_1, %c0_2] : memref<128x128xbf16, #tpu.memory_space<vmem>>, vector<128x128xbf16>
    %cst = arith.constant dense<0.000000e+00> : vector<8x128xf32>
    %2 = tpu.matmul %0, %1, %cst {dimension_numbers = #tpu.dot_dimension_numbers<[1], [0], [0], [1], [0, 0, 1, 1], [], []>} : vector<8x128xbf16>, vector<128x128xbf16>, vector<8x128xf32> -> vector<8x128xf32>
    %c0_3 = arith.constant 0 : index
    %c0_4 = arith.constant 0 : index
    %3 = vector.load %arg3[%c0_3, %c0_4] : memref<1x128xf32, #tpu.memory_space<vmem>>, vector<1x128xf32>
    %4 = vector.broadcast %3 : vector<1x128xf32> to vector<8x128xf32>
    %5 = arith.addf %2, %4 : vector<8x128xf32>
    %6 = arith.truncf %5 : vector<8x128xf32> to vector<8x128xbf16>
    %c0_5 = arith.constant 0 : index
    %c0_6 = arith.constant 0 : index
    %7 = vector.load %arg4[%c0_5, %c0_6] : memref<128x128xbf16, #tpu.memory_space<vmem>>, vector<128x128xbf16>
    %cst_7 = arith.constant dense<0.000000e+00> : vector<8x128xf32>
    %8 = tpu.matmul %6, %7, %cst_7 {dimension_numbers = #tpu.dot_dimension_numbers<[1], [0], [0], [1], [0, 0, 1, 1], [], []>} : vector<8x128xbf16>, vector<128x128xbf16>, vector<8x128xf32> -> vector<8x128xf32>
    %c0_8 = arith.constant 0 : index
    %c0_9 = arith.constant 0 : index
    %9 = vector.load %arg5[%c0_8, %c0_9] : memref<1x128xf32, #tpu.memory_space<vmem>>, vector<1x128xf32>
    %10 = vector.broadcast %9 : vector<1x128xf32> to vector<8x128xf32>
    %11 = arith.addf %8, %10 : vector<8x128xf32>
    %cst_10 = arith.constant -3.000000e+01 : f32
    %12 = vector.broadcast %cst_10 : f32 to vector<8x128xf32>
    %13 = arith.maximumf %11, %12 : vector<8x128xf32>
    %cst_11 = arith.constant 0.000000e+00 : f32
    %14 = vector.broadcast %cst_11 : f32 to vector<8x128xf32>
    %15 = arith.subf %14, %13 : vector<8x128xf32>
    %16 = math.exp %15 : vector<8x128xf32>
    %cst_12 = arith.constant 1.000000e+00 : f32
    %17 = vector.broadcast %cst_12 : f32 to vector<8x128xf32>
    %18 = arith.addf %17, %16 : vector<8x128xf32>
    %19 = tpu.reciprocal %18 {approx = true} : vector<8x128xf32> -> vector<8x128xf32>
    %c0_13 = arith.constant 0 : index
    %c0_14 = arith.constant 0 : index
    %20 = vector.load %arg6[%c0_13, %c0_14] : memref<8x128xf32, #tpu.memory_space<vmem>>, vector<8x128xf32>
    tpu.vector_store %arg6[%c0_13, %c0_14], %19 {strides = array<i32>} : memref<8x128xf32, #tpu.memory_space<vmem>>, vector<8x128xf32>,
    return
  }
  func.func @transform_0(%arg0: i32) -> (i32, i32) {
    %c0_i32 = arith.constant 0 : i32
    %c0_i32_0 = arith.constant 0 : i32
    return %arg0, %c0_i32 : i32, i32
  }
  func.func @transform_1(%arg0: i32) -> (i32, i32) {
    %c0_i32 = arith.constant 0 : i32
    %c0_i32_0 = arith.constant 0 : i32
    %c0_i32_1 = arith.constant 0 : i32
    return %c0_i32, %c0_i32_0 : i32, i32
  }
  func.func @transform_2(%arg0: i32) -> (i32, i32) {
    %c0_i32 = arith.constant 0 : i32
    %c0_i32_0 = arith.constant 0 : i32
    %c0_i32_1 = arith.constant 0 : i32
    return %c0_i32, %c0_i32_0 : i32, i32
  }
  func.func @transform_3(%arg0: i32) -> (i32, i32) {
    %c0_i32 = arith.constant 0 : i32
    %c0_i32_0 = arith.constant 0 : i32
    %c0_i32_1 = arith.constant 0 : i32
    return %c0_i32, %c0_i32_0 : i32, i32
  }
  func.func @transform_4(%arg0: i32) -> (i32, i32) {
    %c0_i32 = arith.constant 0 : i32
    %c0_i32_0 = arith.constant 0 : i32
    %c0_i32_1 = arith.constant 0 : i32
    return %c0_i32, %c0_i32_0 : i32, i32
  }
  func.func @transform_5(%arg0: i32) -> (i32, i32) {
    %c0_i32 = arith.constant 0 : i32
    %c0_i32_0 = arith.constant 0 : i32
    return %arg0, %c0_i32 : i32, i32
  }
}

</mosaic_0001>

<llo_original>
// kernel: tpu_custom_call.1
$region0: #{tpu_custom_call.1}
  #allocation0 [shape = 'u32[]', space=smem, size = 0x4, offset = 0x4, fixed_abs, tag = 'smem constant byte address 0x4 - core index']
  #allocation1 [shape = 'u32[144,128]{1,0:T(1,128)}', space=vmem, size = 0x12000, scoped, tag = 'internal scratch']
  %s0 = inlined_call_operand.hbm [shape: bf16[32,128], index: 0, kind: input, shape index: {}]
  %s1 = inlined_call_operand.hbm [shape: bf16[128,128], index: 1, kind: input, shape index: {}]
  %s2 = inlined_call_operand.vmem [shape: f32[1,128], index: 2, kind: input, shape index: {}]
  %s3 = inlined_call_operand.hbm [shape: bf16[128,128], index: 3, kind: input, shape index: {}]
  %s4 = inlined_call_operand.vmem [shape: f32[1,128], index: 4, kind: input, shape index: {}]
  %s5 = inlined_call_operand.hbm [shape: f32[32,128], index: 5, kind: output, shape index: {}]
  %s6 = sld [smem:[#allocation0]]
  $region65: #{tpu_custom_call.1} parent=0
    _
  %s8 = ssub.s32 1, %s6
  %s9 = scalar_select 0, %s8, %s6
  $region1: #{tpu_custom_call.1} parent=0
    #allocation2 [shape = 'u8[4096]{0}', space=vmem, size = 0x1000, scoped, tag = 'input window, operand 0']
    #allocation3 [shape = 's32[2]{0}', space=sflag, size = 0x8, scoped, tag = 'scoped memory for tpu_custom_call.1']
    #allocation4 [shape = 's32[2]{0}', space=sflag, size = 0x8, scoped, tag = 'scoped memory for tpu_custom_call.1']
    #allocation5 [shape = 'u8[32768]{0}', space=vmem, size = 0x8000, scoped, tag = 'input window, operand 1, single buffered']
    #allocation6 [shape = 's32[1]{0}', space=sflag, size = 0x4, scoped, tag = 'scoped memory for tpu_custom_call.1']
    #allocation7 [shape = 'u8[32768]{0}', space=vmem, size = 0x8000, scoped, tag = 'input window, operand 3, single buffered']
    #allocation8 [shape = 'u8[8192]{0}', space=vmem, size = 0x2000, scoped, tag = 'output window, operand 0']
    %10 = vsyncpa [#allocation3], 0
    %s11 = scalar_lea.sflag [#allocation3], 1
    %12 = vsyncpa %s11, 0
    %13 = vsyncpa [#allocation6], 0
    %14 = vsyncpa [#allocation4], 0
    %s15 = scalar_lea.sflag [#allocation4], 1
    %16 = vsyncpa %s15, 0
    loop: start=0, step=1, limit=6
    $region2: #{tpu_custom_call.1} parent=1 // loop_pre_header
      _
    $region3: #{tpu_custom_call.1} parent=1 // loop_header
      %s18 = sphi 0, %s22
      %p19 = scmp.ge.s32.totalorder %s18, 6
      %s28 = sphi 0, %s30
      %s31 = sphi 0, %s28
      %s32 = sphi 0, %s31
      %s48 = sphi 0, %s32
      %s52 = sphi 0, %s52
      %s54 = sphi 0, %s52
      %s55 = sphi 0, %s54
      %s69 = sphi 0, %s55
      %s73 = sphi 0, %s73
      %s75 = sphi 0, %s73
      %s76 = sphi 0, %s75
      %s90 = sphi 0, %s76
      %s94 = sphi 0, %s94
      %s96 = sphi 0, %s94
      %s97 = sphi 0, %s96
      %s111 = sphi 0, %s97
      %s115 = sphi 0, %s115
      %s117 = sphi 0, %s115
      %s118 = sphi 0, %s117
      %s132 = sphi 0, %s118
      %s138 = sphi 0, %s140
      %s141 = sphi 0, %s138
      %s142 = sphi 0, %s141
      %s158 = sphi 0, %s142
    $region4: #{tpu_custom_call.1} parent=1 // loop_header_branch
      %21 = sbr.rel (%p19) target = $region8
    $region5: #{tpu_custom_call.1} parent=1 // loop_body
      %s23 = ssub.s32 %s18, 1
      %s24 = ssub.s32 %s18, 2
      %s25 = sadd.s32 %s18, 1
      %s26 = ssub.s32 %s18, %s25
      %p27 = scmp.eq.s32.totalorder %s26, 0
      %s29 = sadd.s32 %s28, 1
      %s30 = scalar_select %p27, %s28, %s29
      %p33 = pneg %p27
      %p34 = scmp.eq.s32.totalorder %s18, 3
      %p35 = por %p33, %p34
      %p36 = scmp.ne.s32.totalorder %s28, %s31
      %p37 = scmp.eq.s32.totalorder %s18, 0
      %p38 = por %p36, %p37
      %p39 = scmp.ne.s32.totalorder %s28, %s31
      %p40 = scmp.eq.s32.totalorder %s23, 3
      %p41 = por %p39, %p40
      %p42 = scmp.ne.s32.totalorder %s31, %s32
      %p43 = scmp.eq.s32.totalorder %s23, 0
      %p44 = por %p42, %p43
      %p45 = scmp.ne.s32.totalorder %s31, %s32
      %p46 = scmp.eq.s32.totalorder %s24, 3
      %p47 = por %p45, %p46
      %p49 = scmp.ne.s32.totalorder %s32, %s48
      %p50 = scmp.eq.s32.totalorder %s24, 0
      %p51 = por %p49, %p50
      %s53 = sadd.s32 %s52, 1
      %p56 = scmp.eq.s32.totalorder %s18, 3
      %p57 = scmp.ne.s32.totalorder %s52, %s54
      %p58 = scmp.eq.s32.totalorder %s18, 0
      %p59 = por %p57, %p58
      %p60 = scmp.ne.s32.totalorder %s52, %s54
      %p61 = scmp.eq.s32.totalorder %s23, 3
      %p62 = por %p60, %p61
      %p63 = scmp.ne.s32.totalorder %s54, %s55
      %p64 = scmp.eq.s32.totalorder %s23, 0
      %p65 = por %p63, %p64
      %p66 = scmp.ne.s32.totalorder %s54, %s55
      %p67 = scmp.eq.s32.totalorder %s24, 3
      %p68 = por %p66, %p67
      %p70 = scmp.ne.s32.totalorder %s55, %s69
      %p71 = scmp.eq.s32.totalorder %s24, 0
      %p72 = por %p70, %p71
      %s74 = sadd.s32 %s73, 1
      %p77 = scmp.eq.s32.totalorder %s18, 3
      %p78 = scmp.ne.s32.totalorder %s73, %s75
      %p79 = scmp.eq.s32.totalorder %s18, 0
      %p80 = por %p78, %p79
      %p81 = scmp.ne.s32.totalorder %s73, %s75
      %p82 = scmp.eq.s32.totalorder %s23, 3
      %p83 = por %p81, %p82
      %p84 = scmp.ne.s32.totalorder %s75, %s76
      %p85 = scmp.eq.s32.totalorder %s23, 0
      %p86 = por %p84, %p85
      %p87 = scmp.ne.s32.totalorder %s75, %s76
      %p88 = scmp.eq.s32.totalorder %s24, 3
      %p89 = por %p87, %p88
      %p91 = scmp.ne.s32.totalorder %s76, %s90
      %p92 = scmp.eq.s32.totalorder %s24, 0
      %p93 = por %p91, %p92
      %s95 = sadd.s32 %s94, 1
      %p98 = scmp.eq.s32.totalorder %s18, 3
      %p99 = scmp.ne.s32.totalorder %s94, %s96
      %p100 = scmp.eq.s32.totalorder %s18, 0
      %p101 = por %p99, %p100
      %p102 = scmp.ne.s32.totalorder %s94, %s96
      %p103 = scmp.eq.s32.totalorder %s23, 3
      %p104 = por %p102, %p103
      %p105 = scmp.ne.s32.totalorder %s96, %s97
      %p106 = scmp.eq.s32.totalorder %s23, 0
      %p107 = por %p105, %p106
      %p108 = scmp.ne.s32.totalorder %s96, %s97
      %p109 = scmp.eq.s32.totalorder %s24, 3
      %p110 = por %p108, %p109
      %p112 = scmp.ne.s32.totalorder %s97, %s111
      %p113 = scmp.eq.s32.totalorder %s24, 0
      %p114 = por %p112, %p113
      %s116 = sadd.s32 %s115, 1
      %p119 = scmp.eq.s32.totalorder %s18, 3
      %p120 = scmp.ne.s32.totalorder %s115, %s117
      %p121 = scmp.eq.s32.totalorder %s18, 0
      %p122 = por %p120, %p121
      %p123 = scmp.ne.s32.totalorder %s115, %s117
      %p124 = scmp.eq.s32.totalorder %s23, 3
      %p125 = por %p123, %p124
      %p126 = scmp.ne.s32.totalorder %s117, %s118
      %p127 = scmp.eq.s32.totalorder %s23, 0
      %p128 = por %p126, %p127
      %p129 = scmp.ne.s32.totalorder %s117, %s118
      %p130 = scmp.eq.s32.totalorder %s24, 3
      %p131 = por %p129, %p130
      %p133 = scmp.ne.s32.totalorder %s118, %s132
      %p134 = scmp.eq.s32.totalorder %s24, 0
      %p135 = por %p133, %p134
      %s136 = ssub.s32 %s18, %s25
      %p137 = scmp.eq.s32.totalorder %s136, 0
      %s139 = sadd.s32 %s138, 1
      %s140 = scalar_select %p137, %s138, %s139
      %p143 = pneg %p137
      %p144 = scmp.eq.s32.totalorder %s18, 3
      %p145 = por %p143, %p144
      %p146 = scmp.ne.s32.totalorder %s138, %s141
      %p147 = scmp.eq.s32.totalorder %s18, 0
      %p148 = por %p146, %p147
      %p149 = scmp.ne.s32.totalorder %s138, %s141
      %p150 = scmp.eq.s32.totalorder %s23, 3
      %p151 = por %p149, %p150
      %p152 = scmp.ne.s32.totalorder %s141, %s142
      %p153 = scmp.eq.s32.totalorder %s23, 0
      %p154 = por %p152, %p153
      %p155 = scmp.ne.s32.totalorder %s141, %s142
      %p156 = scmp.eq.s32.totalorder %s24, 3
      %p157 = por %p155, %p156
      %p159 = scmp.ne.s32.totalorder %s142, %s158
      %p160 = scmp.eq.s32.totalorder %s24, 0
      %p161 = por %p159, %p160
      %p162 = scmp.le.s32.totalorder 1, %s18
      %p163 = scmp.lt.s32.totalorder %s18, 5
      %p164 = pnand %p162, %p163
      %p165 = pneg %p164
      // Predicated region
      $region9: #{tpu_custom_call.1} parent=5 // pred_check
        _
      $region10: #{tpu_custom_call.1} parent=5 // pred_check_branch
        %167 = sbr.rel (%p164) target = $region12
      $region11: #{tpu_custom_call.1} parent=5 // pred_region
        %s168 = ssub.s32 %s18, 1
        // Predicated region
        $region13: #{tpu_custom_call.1} parent=11 // pred_check
          %p169 = pneg %p65
        $region14: #{tpu_custom_call.1} parent=11 // pred_check_branch
          %171 = sbr.rel (%p169) target = $region16
        $region15: #{tpu_custom_call.1} parent=11 // pred_region
          %s173 = ssub.s32 1024, 1024
          %174 = vsyncadd [#allocation6], %s173
          %s175 = sshll.u32 [#allocation5], 4
          %s176 = int_to_ptr.vmem [resolvable:$true] %s175
          %181 = dma.hbm_to_vmem [thread:$0]  %s1, 1024, %s176, [#allocation6], 64, 64, 4
        $region16: #{tpu_custom_call.1} parent=11 // pred_fallthru
          _
        // Predicated region
        $region17: #{tpu_custom_call.1} parent=11 // pred_check
          %p182 = pneg %p86
        $region18: #{tpu_custom_call.1} parent=11 // pred_check_branch
          %184 = sbr.rel (%p182) target = $region20
        $region19: #{tpu_custom_call.1} parent=11 // pred_region
          _
        $region20: #{tpu_custom_call.1} parent=11 // pred_fallthru
          _
        // Predicated region
        $region21: #{tpu_custom_call.1} parent=11 // pred_check
          %p185 = pneg %p107
        $region22: #{tpu_custom_call.1} parent=11 // pred_check_branch
          %187 = sbr.rel (%p185) target = $region24
        $region23: #{tpu_custom_call.1} parent=11 // pred_region
          %s189 = ssub.s32 1024, 1024
          %190 = vsyncadd [#allocation6], %s189
          %s191 = sshll.u32 [#allocation7], 4
          %s192 = int_to_ptr.vmem [resolvable:$true] %s191
          %197 = dma.hbm_to_vmem [thread:$0]  %s3, 1024, %s192, [#allocation6], 64, 64, 4
        $region24: #{tpu_custom_call.1} parent=11 // pred_fallthru
          _
        // Predicated region
        $region25: #{tpu_custom_call.1} parent=11 // pred_check
          %p198 = pneg %p128
        $region26: #{tpu_custom_call.1} parent=11 // pred_check_branch
          %200 = sbr.rel (%p198) target = $region28
        $region27: #{tpu_custom_call.1} parent=11 // pred_region
          _
        $region28: #{tpu_custom_call.1} parent=11 // pred_fallthru
          _
      $region12: #{tpu_custom_call.1} parent=5 // pred_fallthru
        _
      %p201 = scmp.lt.s32.totalorder %s18, 4
      // Predicated region
      $region29: #{tpu_custom_call.1} parent=5 // pred_check
        %p202 = pneg %p201
      $region30: #{tpu_custom_call.1} parent=5 // pred_check_branch
        %204 = sbr.rel (%p202) target = $region32
      $region31: #{tpu_custom_call.1} parent=5 // pred_region
        // Predicated region
        $region33: #{tpu_custom_call.1} parent=31 // pred_check
          %p205 = pneg %p38
        $region34: #{tpu_custom_call.1} parent=31 // pred_check_branch
          %207 = sbr.rel (%p205) target = $region36
        $region35: #{tpu_custom_call.1} parent=31 // pred_region
          %s208 = sand.u32 %s28, 1
          %s209 = scalar_lea.sflag [#allocation3], %s208
          %s210 = sand.u32 %s28, 1
          %s211 = smul.addr %s210, 4
          %s212 = scalar_lea.vmem [#allocation2], %s211
          %s214 = ssub.s32 64, 64
          %215 = vsyncadd %s209, %s214
          %s216 = smul.addr %s18, 64
          %s217 = scalar_lea.hbm %s0, %s216
          %s219 = sshll.u32 %s212, 4
          %s220 = int_to_ptr.vmem [resolvable:$true] %s219
          %222 = dma.hbm_to_vmem [thread:$0]  %s217, 64, %s220, %s209
        $region36: #{tpu_custom_call.1} parent=31 // pred_fallthru
          _
      $region32: #{tpu_custom_call.1} parent=5 // pred_fallthru
        _
      %p223 = scmp.le.s32.totalorder 1, %s18
      %p224 = scmp.lt.s32.totalorder %s18, 5
      %p225 = pnand %p223, %p224
      %p226 = pneg %p225
      // Predicated region
      $region37: #{tpu_custom_call.1} parent=5 // pred_check
        _
      $region38: #{tpu_custom_call.1} parent=5 // pred_check_branch
        %228 = sbr.rel (%p225) target = $region40
      $region39: #{tpu_custom_call.1} parent=5 // pred_region
        %s229 = ssub.s32 %s18, 1
        %s230 = sand.u32 %s31, 1
        %s231 = scalar_lea.sflag [#allocation3], %s230
        %s232 = sand.u32 %s31, 1
        %s233 = smul.addr %s232, 4
        %s234 = scalar_lea.vmem [#allocation2], %s233
        // Predicated region
        $region41: #{tpu_custom_call.1} parent=39 // pred_check
          %p235 = pneg %p44
        $region42: #{tpu_custom_call.1} parent=39 // pred_check_branch
          %237 = sbr.rel (%p235) target = $region44
        $region43: #{tpu_custom_call.1} parent=39 // pred_region
          %238 = dma.done %s231, 64
        $region44: #{tpu_custom_call.1} parent=39 // pred_fallthru
          _
        // Predicated region
        $region45: #{tpu_custom_call.1} parent=39 // pred_check
          %p239 = pneg %p65
        $region46: #{tpu_custom_call.1} parent=39 // pred_check_branch
          %241 = sbr.rel (%p239) target = $region48
        $region47: #{tpu_custom_call.1} parent=39 // pred_region
          %242 = dma.done [#allocation6], 1024
        $region48: #{tpu_custom_call.1} parent=39 // pred_fallthru
          _
        // Predicated region
        $region49: #{tpu_custom_call.1} parent=39 // pred_check
          %p243 = pneg %p107
        $region50: #{tpu_custom_call.1} parent=39 // pred_check_branch
          %245 = sbr.rel (%p243) target = $region52
        $region51: #{tpu_custom_call.1} parent=39 // pred_region
          %246 = dma.done [#allocation6], 1024
        $region52: #{tpu_custom_call.1} parent=39 // pred_fallthru
          _
        %s247 = sand.u32 %s31, 1
        %s248 = scalar_lea.sflag [#allocation3], %s247
        %s249 = sand.u32 %s31, 1
        %s250 = smul.addr %s249, 4
        %s251 = scalar_lea.vmem [#allocation2], %s250
        %p252 = pneg %p44
        %p253 = pneg %p41
        %p254 = pneg %p65
        %p255 = pneg %p62
        %p256 = pneg %p86
        %p257 = pneg %p83
        %p258 = pneg %p107
        %p259 = pneg %p104
        %p260 = pneg %p128
        %p261 = pneg %p125
        %p262 = pneg %p154
        %p263 = pneg %p151
        %s264 = sand.u32 %s141, 1
        %s265 = scalar_lea.sflag [#allocation4], %s264
        %s266 = sand.u32 %s141, 1
        %s267 = smul.addr %s266, 8
        %s268 = scalar_lea.vmem [#allocation8], %s267
        %v270 = vld [vmem:[%s234] sm:$0xf]
        %v271 = vld [vmem:[#allocation5] sm:$0xf]
        %v272 = vld [vmem:[#allocation5 + $0x4] sm:$0xf]
        %v273 = vld [vmem:[#allocation5 + $0x8] sm:$0xf]
        %v274 = vld [vmem:[#allocation5 + $0xc] sm:$0xf]
        %v275 = vld [vmem:[#allocation5 + $0x10] sm:$0xf]
        %v276 = vld [vmem:[#allocation5 + $0x14] sm:$0xf]
        %v277 = vld [vmem:[#allocation5 + $0x18] sm:$0xf]
        %v278 = vld [vmem:[#allocation5 + $0x1c] sm:$0xf]
        %v279 = vld [vmem:[#allocation5 + $0x20] sm:$0xf]
        %v280 = vld [vmem:[#allocation5 + $0x24] sm:$0xf]
        %v281 = vld [vmem:[#allocation5 + $0x28] sm:$0xf]
        %v282 = vld [vmem:[#allocation5 + $0x2c] sm:$0xf]
        %v283 = vld [vmem:[#allocation5 + $0x30] sm:$0xf]
        %v284 = vld [vmem:[#allocation5 + $0x34] sm:$0xf]
        %v285 = vld [vmem:[#allocation5 + $0x38] sm:$0xf]
        %v286 = vld [vmem:[#allocation5 + $0x3c] sm:$0xf]
        %v287 = vld [vmem:[%s2] sm:$0x1]
        %v289 = vlaneseq
        %v290 = vshrl.u32 %v289, 7
        %v291 = vsub.s32 0, %v290
        %v292 = vrot.slane %v287, %v291
        %v310 = vunpack.c.l.b16 %v271
        %v311 = vunpack.c.l.b16 %v272
        %v312 = vunpack.c.l.b16 %v273
        %v313 = vunpack.c.l.b16 %v274
        %v314 = vunpack.c.l.b16 %v275
        %v315 = vunpack.c.l.b16 %v276
        %v316 = vunpack.c.l.b16 %v277
        %v317 = vunpack.c.l.b16 %v278
        %v318 = vunpack.c.l.b16 %v279
        %v319 = vunpack.c.l.b16 %v280
        %v320 = vunpack.c.l.b16 %v281
        %v321 = vunpack.c.l.b16 %v282
        %v322 = vunpack.c.l.b16 %v283
        %v323 = vunpack.c.l.b16 %v284
        %v324 = vunpack.c.l.b16 %v285
        %v325 = vunpack.c.l.b16 %v286
        %v326 = vpack.c.b16 %v311, %v310
        %v327 = vpack.c.b16 %v313, %v312
        %v328 = vpack.c.b16 %v315, %v314
        %v329 = vpack.c.b16 %v317, %v316
        %v330 = vpack.c.b16 %v319, %v318
        %v331 = vpack.c.b16 %v321, %v320
        %v332 = vpack.c.b16 %v323, %v322
        %v333 = vpack.c.b16 %v325, %v324
        %342 = vmatprep.subr.bf16.mxu0 0
        %343 = vmatpush1.bf16.msra.mxu0 %v333
        %344 = vmatprep.subr.bf16.mxu0 0
        %345 = vmatpush1.bf16.msra.mxu0 %v332
        %346 = vmatprep.subr.bf16.mxu0 0
        %347 = vmatpush1.bf16.msra.mxu0 %v331
        %348 = vmatprep.subr.bf16.mxu0 0
        %349 = vmatpush1.bf16.msra.mxu0 %v330
        %350 = vmatprep.subr.bf16.mxu0 0
        %351 = vmatpush1.bf16.msra.mxu0 %v329
        %352 = vmatprep.subr.bf16.mxu0 0
        %353 = vmatpush1.bf16.msra.mxu0 %v328
        %354 = vmatprep.subr.bf16.mxu0 0
        %355 = vmatpush1.bf16.msra.mxu0 %v327
        %356 = vmatprep.subr.bf16.mxu0 0
        %357 = vmatpush1.bf16.msra.mxu0 %v326
        %358 = vmatprep.subr.bf16.mxu0 0
        %359 = vmatpush2.bf16.msra.mxu0 0
        %360 = vmatprep.subr.bf16.mxu0 0
        %361 = vmatpush2.bf16.msra.mxu0 0
        %362 = vmatprep.subr.bf16.mxu0 0
        %363 = vmatpush2.bf16.msra.mxu0 0
        %364 = vmatprep.subr.bf16.mxu0 0
        %365 = vmatpush2.bf16.msra.mxu0 0
        %366 = vmatprep.subr.bf16.mxu0 0
        %367 = vmatpush2.bf16.msra.mxu0 0
        %368 = vmatprep.subr.bf16.mxu0 0
        %369 = vmatpush2.bf16.msra.mxu0 0
        %370 = vmatprep.subr.bf16.mxu0 0
        %371 = vmatpush2.bf16.msra.mxu0 0
        %372 = vmatprep.subr.bf16.mxu0 0
        %373 = vmatpush2.bf16.msra.mxu0 0
        %374 = vmatprep.mubr.bf16.mxu0 0
        %375 = vmatmul.mubr.bf16.gmra.mxu0 %v270
        %v376 = vpop.f32.mrf.mxu0
        %v377 = vadd.f32 %v292, %v376
        %v378 = vpop.f32.mrf.mxu0
        %v379 = vpop.f32.mrf.mxu0
        %v380 = vpop.f32.mrf.mxu0
        %381 = vdwg.mxu0
        %v382 = vpack.c.bf16 %v377, %v377
        %v383 = vld [vmem:[#allocation7] sm:$0xf]
        %v384 = vld [vmem:[#allocation7 + $0x4] sm:$0xf]
        %v385 = vld [vmem:[#allocation7 + $0x8] sm:$0xf]
        %v386 = vld [vmem:[#allocation7 + $0xc] sm:$0xf]
        %v387 = vld [vmem:[#allocation7 + $0x10] sm:$0xf]
        %v388 = vld [vmem:[#allocation7 + $0x14] sm:$0xf]
        %v389 = vld [vmem:[#allocation7 + $0x18] sm:$0xf]
        %v390 = vld [vmem:[#allocation7 + $0x1c] sm:$0xf]
        %v391 = vld [vmem:[#allocation7 + $0x20] sm:$0xf]
        %v392 = vld [vmem:[#allocation7 + $0x24] sm:$0xf]
        %v393 = vld [vmem:[#allocation7 + $0x28] sm:$0xf]
        %v394 = vld [vmem:[#allocation7 + $0x2c] sm:$0xf]
        %v395 = vld [vmem:[#allocation7 + $0x30] sm:$0xf]
        %v396 = vld [vmem:[#allocation7 + $0x34] sm:$0xf]
        %v397 = vld [vmem:[#allocation7 + $0x38] sm:$0xf]
        %v398 = vld [vmem:[#allocation7 + $0x3c] sm:$0xf]
        %v399 = vld [vmem:[%s4] sm:$0x1]
        %v401 = vlaneseq
        %v402 = vshrl.u32 %v401, 7
        %v403 = vsub.s32 0, %v402
        %v404 = vrot.slane %v399, %v403
        %v422 = vunpack.c.l.b16 %v383
        %v423 = vunpack.c.l.b16 %v384
        %v424 = vunpack.c.l.b16 %v385
        %v425 = vunpack.c.l.b16 %v386
        %v426 = vunpack.c.l.b16 %v387
        %v427 = vunpack.c.l.b16 %v388
        %v428 = vunpack.c.l.b16 %v389
        %v429 = vunpack.c.l.b16 %v390
        %v430 = vunpack.c.l.b16 %v391
        %v431 = vunpack.c.l.b16 %v392
        %v432 = vunpack.c.l.b16 %v393
        %v433 = vunpack.c.l.b16 %v394
        %v434 = vunpack.c.l.b16 %v395
        %v435 = vunpack.c.l.b16 %v396
        %v436 = vunpack.c.l.b16 %v397
        %v437 = vunpack.c.l.b16 %v398
        %v438 = vpack.c.b16 %v423, %v422
        %v439 = vpack.c.b16 %v425, %v424
        %v440 = vpack.c.b16 %v427, %v426
        %v441 = vpack.c.b16 %v429, %v428
        %v442 = vpack.c.b16 %v431, %v430
        %v443 = vpack.c.b16 %v433, %v432
        %v444 = vpack.c.b16 %v435, %v434
        %v445 = vpack.c.b16 %v437, %v436
        %454 = vmatprep.subr.bf16.mxu0 0
        %455 = vmatpush1.bf16.msra.mxu0 %v445
        %456 = vmatprep.subr.bf16.mxu0 0
        %457 = vmatpush1.bf16.msra.mxu0 %v444
        %458 = vmatprep.subr.bf16.mxu0 0
        %459 = vmatpush1.bf16.msra.mxu0 %v443
        %460 = vmatprep.subr.bf16.mxu0 0
        %461 = vmatpush1.bf16.msra.mxu0 %v442
        %462 = vmatprep.subr.bf16.mxu0 0
        %463 = vmatpush1.bf16.msra.mxu0 %v441
        %464 = vmatprep.subr.bf16.mxu0 0
        %465 = vmatpush1.bf16.msra.mxu0 %v440
        %466 = vmatprep.subr.bf16.mxu0 0
        %467 = vmatpush1.bf16.msra.mxu0 %v439
        %468 = vmatprep.subr.bf16.mxu0 0
        %469 = vmatpush1.bf16.msra.mxu0 %v438
        %470 = vmatprep.subr.bf16.mxu0 0
        %471 = vmatpush2.bf16.msra.mxu0 0
        %472 = vmatprep.subr.bf16.mxu0 0
        %473 = vmatpush2.bf16.msra.mxu0 0
        %474 = vmatprep.subr.bf16.mxu0 0
        %475 = vmatpush2.bf16.msra.mxu0 0
        %476 = vmatprep.subr.bf16.mxu0 0
        %477 = vmatpush2.bf16.msra.mxu0 0
        %478 = vmatprep.subr.bf16.mxu0 0
        %479 = vmatpush2.bf16.msra.mxu0 0
        %480 = vmatprep.subr.bf16.mxu0 0
        %481 = vmatpush2.bf16.msra.mxu0 0
        %482 = vmatprep.subr.bf16.mxu0 0
        %483 = vmatpush2.bf16.msra.mxu0 0
        %484 = vmatprep.subr.bf16.mxu0 0
        %485 = vmatpush2.bf16.msra.mxu0 0
        %486 = vmatprep.mubr.bf16.mxu0 0
        %487 = vmatmul.mubr.bf16.gmra.mxu0 %v382
        %v488 = vpop.f32.mrf.mxu0
        %v489 = vadd.f32 %v404, %v488
        %v490 = vpop.f32.mrf.mxu0
        %v491 = vpop.f32.mrf.mxu0
        %v492 = vpop.f32.mrf.mxu0
        %493 = vdwg.mxu0
        %v494 = vmax.f32 %v489, -30.0
        %v495 = vsub.f32 0.0, %v494
        %v496 = vmul.f32 %v495, 1.442695
        %v497 = vpow.pop %v496
        %v498 = vadd.f32 %v497, 1.0
        %v499 = vrcp.pop %v498
        %500 = vst [vmem:[%s268] sm:$0xff] %v499
        %s501 = sand.u32 %s141, 1
        %s502 = scalar_lea.sflag [#allocation4], %s501
        %s503 = sand.u32 %s141, 1
        %s504 = smul.addr %s503, 8
        %s505 = scalar_lea.vmem [#allocation8], %s504
        // Predicated region
        $region53: #{tpu_custom_call.1} parent=39 // pred_check
          %p506 = pneg %p151
        $region54: #{tpu_custom_call.1} parent=39 // pred_check_branch
          %508 = sbr.rel (%p506) target = $region56
        $region55: #{tpu_custom_call.1} parent=39 // pred_region
          %s510 = ssub.s32 128, 128
          %511 = vsyncadd %s502, %s510
          %s512 = smul.addr %s23, 128
          %s513 = scalar_lea.hbm %s5, %s512
          %s515 = sshll.u32 %s505, 4
          %s516 = int_to_ptr.vmem [resolvable:$true] %s515
          %518 = dma.vmem_to_hbm [thread:$0]  %s516, 128, %s513, %s502
        $region56: #{tpu_custom_call.1} parent=39 // pred_fallthru
          _
      $region40: #{tpu_custom_call.1} parent=5 // pred_fallthru
        _
      %p519 = scmp.le.s32.totalorder 2, %s18
      // Predicated region
      $region57: #{tpu_custom_call.1} parent=5 // pred_check
        %p520 = pneg %p519
      $region58: #{tpu_custom_call.1} parent=5 // pred_check_branch
        %522 = sbr.rel (%p520) target = $region60
      $region59: #{tpu_custom_call.1} parent=5 // pred_region
        %s523 = ssub.s32 %s18, 2
        // Predicated region
        $region61: #{tpu_custom_call.1} parent=59 // pred_check
          %p524 = pneg %p157
        $region62: #{tpu_custom_call.1} parent=59 // pred_check_branch
          %526 = sbr.rel (%p524) target = $region64
        $region63: #{tpu_custom_call.1} parent=59 // pred_region
          %s527 = sand.u32 %s142, 1
          %s528 = scalar_lea.sflag [#allocation4], %s527
          %s529 = sand.u32 %s142, 1
          %s530 = smul.addr %s529, 8
          %s531 = scalar_lea.vmem [#allocation8], %s530
          %532 = dma.done %s528, 128
        $region64: #{tpu_custom_call.1} parent=59 // pred_fallthru
          _
      $region60: #{tpu_custom_call.1} parent=5 // pred_fallthru
        _
    $region6: #{tpu_custom_call.1} parent=1 // loop_footer
      %s22 = sadd.s32 1, %s18
    $region7: #{tpu_custom_call.1} parent=1 // loop_footer_branch
      %17 = sbr.rel target = $region3
    $region8: #{tpu_custom_call.1} parent=1 // loop_exit
      _
    %533 = vsyncpa [#allocation3], 1
    %s534 = scalar_lea.sflag [#allocation3], 1
    %535 = vsyncpa %s534, 1
    %536 = vsyncpa [#allocation6], 1
    %537 = vsyncpa [#allocation4], 1
    %s538 = scalar_lea.sflag [#allocation4], 1
    %539 = vsyncpa %s538, 1

</llo_original>
